<compile_context>
chip_gen: v6e
topology: v6e:2x2x1
jax: 0.10.0
libtpu: 0.0.40
codegen_flags: <defaults>
</compile_context>

<pallas_src>
import jax
import jax.numpy as jnp
from jax.experimental import pallas as pl
from jax.experimental.pallas import tpu as pltpu


def _build_prompt_frame(pad, image_size, pad_size, dtype):
    """Assemble the [1, C, S, S] prompt frame from the pad parameter."""
    C = pad.shape[1]
    base = image_size - 2 * pad_size
    pad_up = pad[:, :, :, :image_size]                                      # [1,C,P,S]
    pad_down = pad[:, :, :, image_size:2 * image_size]                      # [1,C,P,S]
    pad_left = jnp.swapaxes(
        pad[:, :, :, 2 * image_size:3 * image_size - 2 * pad_size], 2, 3)   # [1,C,base,P]
    pad_right = jnp.swapaxes(
        pad[:, :, :, 3 * image_size - 2 * pad_size:], 2, 3)                 # [1,C,base,P]
    mid = jnp.concatenate(
        [pad_left, jnp.zeros((1, C, base, base), dtype), pad_right], axis=3)
    prompt = jnp.concatenate([pad_up, mid, pad_down], axis=2)               # [1,C,S,S]
    return prompt.astype(dtype)


def _sublane_tile(dtype):
    """Minimal sublane tile for the dtype: 8 (f32), 16 (bf16), 32 (int8/fp8)."""
    return max(8, 32 // jnp.dtype(dtype).itemsize)


def _pick_batch_tile(B, sublane):
    """Batch rows per block: a multiple of the sublane tile that divides B,
    or the full batch extent (always a legal block shape)."""
    if B <= sublane:
        return B
    bt = min(B // sublane, 8) * sublane          # cap rows; feature dim carries the bytes
    while bt >= sublane:
        if B % bt == 0:
            return bt
        bt -= sublane
    return B                                     # no aligned divisor -> full extent


def _pick_feature_tile(total, bt, itemsize, block_bytes=4 << 20, lane=128):
    """Largest 128-multiple divisor of `total` keeping the (bt, tile_n) block
    under ~block_bytes. Falls back to the full extent (always legal)."""
    budget = max(lane, (block_bytes // itemsize) // max(bt, 1))
    if total % lane != 0 or total <= budget:
        # TODO(synk): pad `total` up to a 128 multiple for odd C*S*S to keep
        # every vst unmasked; fine for typical image shapes (3*224*224 etc.).
        return total
    t = (budget // lane) * lane
    while t >= lane:
        if total % t == 0:
            return t
        t -= lane
    return total


def _maybe_split_feature(total, tile_n, lane=128):
    """Ensure >=2 feature blocks (megacore on v7x) when cheaply possible."""
    if tile_n != total or total % lane != 0 or total < 2 * lane:
        return tile_n
    t = (total // 2 // lane) * lane
    while t >= lane:
        if total % t == 0:
            return t
        t -= lane
    return tile_n


def _add_prompt_kernel(x_ref, p_ref, o_ref):
    # One lane-dense read-add-store per block; the (1, tile_n) prompt tile
    # broadcasts over sublanes in the VPU (negligible for a mem-bound add).
    o_ref[...] = x_ref[...] + p_ref[...]


def pad_prompter_forward(x, pad, image_size, pad_size):
    """x: [B, C, S, S], pad: [1, C, P, 4*(S-P)] -> [B, C, S, S]."""
    B, C, H, W = x.shape
    assert H == image_size and W == image_size

    # One-time precompute of the batch-invariant prompt frame.
    prompt = _build_prompt_frame(pad, image_size, pad_size, x.dtype)        # [1,C,S,S]

    # Flatten contiguous NCHW into a lane-dense 2D view.
    total = C * H * W
    x2 = x.reshape(B, total)
    p2 = prompt.reshape(1, total)

    itemsize = jnp.dtype(x.dtype).itemsize
    sublane = _sublane_tile(x.dtype)
    bt = _pick_batch_tile(B, sublane)                 # batch tile first (sublane aligned)
    tile_n = _pick_feature_tile(total, bt, itemsize)  # byte-budgeted, 128-aligned
    tile_n = _maybe_split_feature(total, tile_n)      # >=2 feature blocks when possible

    nfeat = total // tile_n
    nbatch = B // bt

    # VMEM footprint: double-buffered x + out blocks, double-buffered prompt tile.
    block_bytes = bt * tile_n * itemsize
    prompt_bytes = tile_n * itemsize
    footprint = 4 * block_bytes + 2 * prompt_bytes
    vmem_limit = int(min(max(32 << 20, footprint * 3 // 2 + (2 << 20)), 56 << 20))

    out2 = pl.pallas_call(
        _add_prompt_kernel,
        out_shape=jax.ShapeDtypeStruct((B, total), x.dtype),
        grid_spec=pltpu.PrefetchScalarGridSpec(
            num_scalar_prefetch=0,
            grid=(nfeat, nbatch),                     # batch innermost
            in_specs=[
                pl.BlockSpec((bt, tile_n), lambda j, i: (i, j)),
                # Prompt block index is constant along the inner batch axis,
                # so it is DMA'd once per feature block (1x total traffic).
                pl.BlockSpec((1, tile_n), lambda j, i: (0, j)),
            ],
            out_specs=pl.BlockSpec((bt, tile_n), lambda j, i: (i, j)),
        ),
        compiler_params=pltpu.CompilerParams(
            dimension_semantics=("parallel", "arbitrary"),
            vmem_limit_bytes=vmem_limit),
        # Reuses x's HBM buffer for the output when the caller donates x;
        # otherwise XLA inserts a copy and semantics are unchanged.
        input_output_aliases={0: 0},
    )(x2, p2)

    return out2.reshape(B, C, H, W)


def pad_prompter_reference(x, pad, image_size, pad_size):
    """Pure-JAX transcription of PadPrompter.forward for verification."""
    base = image_size - 2 * pad_size
    pad_up = pad[:, :, :, :image_size]
    pad_down = pad[:, :, :, image_size:2 * image_size]
    pad_left = jnp.swapaxes(
        pad[:, :, :, 2 * image_size:3 * image_size - 2 * pad_size], 2, 3)
    pad_right = jnp.swapaxes(
        pad[:, :, :, 3 * image_size - 2 * pad_size:], 2, 3)
    base_blk = jnp.zeros((1, pad.shape[1], base, base), x.dtype)
    prompt = jnp.concatenate([pad_left, base_blk, pad_right], axis=3)
    prompt = jnp.concatenate([pad_up, prompt, pad_down], axis=2)
    return x + prompt


if __name__ == "__main__":
    # state = {'prompt_size': 4, 'image_size': 16, 'epsilon': ...}; module uses 3 channels.
    image_size = 16
    pad_size = 4
    B, C = 2, 3

    key = jax.random.PRNGKey(0)
    kx, kp = jax.random.split(key)
    x = jax.random.normal(kx, (B, C, image_size, image_size), jnp.float32)
    # Module __init__ zero-inits `pad`; use a non-zero init so the add is exercised.
    pad = 0.1 * jax.random.normal(
        kp, (1, C, pad_size, 4 * (image_size - pad_size)), jnp.float32)
    # TODO(synk): perturbations()/padsum() use torch.distributed broadcast +
    # in-place param updates (training-time noise utilities); not part of
    # forward, omitted.

    out = pad_prompter_forward(x, pad, image_size, pad_size)
    out = jax.block_until_ready(out)

    ref = pad_prompter_reference(x, pad, image_size, pad_size)
    assert out.shape == (B, C, image_size, image_size)
    assert jnp.allclose(out, ref, atol=1e-6, rtol=1e-6), "mismatch vs reference"
    print("KERNEL_OK")
</pallas_src>

<mosaic_0001>
module attributes {stable_mosaic.version = 11 : i64} {
  func.func @_add_prompt_kernel(%arg0: i32, %arg1: i32, %arg2: memref<2x384xf32, #tpu.memory_space<vmem>>, %arg3: memref<1x384xf32, #tpu.memory_space<vmem>>, %arg4: memref<2x384xf32, #tpu.memory_space<vmem>>) attributes {dimension_semantics = [#tpu.dimension_semantics<parallel>, #tpu.dimension_semantics<arbitrary>], iteration_bounds = array<i64: 2, 1>, scalar_prefetch = 0 : i64, scratch_operands = 0 : i64, tpu.core_type = #tpu.core_type<tc>, window_params = [{transform_indices = @transform_0, window_bounds = array<i64: 2, 384>}, {transform_indices = @transform_1, window_bounds = array<i64: 1, 384>}, {transform_indices = @transform_2, window_bounds = array<i64: 2, 384>}]} {
    %c0 = arith.constant 0 : index
    %c0_0 = arith.constant 0 : index
    %0 = vector.load %arg2[%c0, %c0_0] : memref<2x384xf32, #tpu.memory_space<vmem>>, vector<2x384xf32>
    %c0_1 = arith.constant 0 : index
    %c0_2 = arith.constant 0 : index
    %1 = vector.load %arg3[%c0_1, %c0_2] : memref<1x384xf32, #tpu.memory_space<vmem>>, vector<1x384xf32>
    %2 = vector.broadcast %1 : vector<1x384xf32> to vector<2x384xf32>
    %3 = arith.addf %0, %2 : vector<2x384xf32>
    %c0_3 = arith.constant 0 : index
    %c0_4 = arith.constant 0 : index
    %4 = vector.load %arg4[%c0_3, %c0_4] : memref<2x384xf32, #tpu.memory_space<vmem>>, vector<2x384xf32>
    tpu.vector_store %arg4[%c0_3, %c0_4], %3 {strides = array<i32>} : memref<2x384xf32, #tpu.memory_space<vmem>>, vector<2x384xf32>,
    return
  }
  func.func @transform_0(%arg0: i32, %arg1: i32) -> (i32, i32) {
    %c0_i32 = arith.constant 0 : i32
    return %arg1, %arg0 : i32, i32
  }
  func.func @transform_1(%arg0: i32, %arg1: i32) -> (i32, i32) {
    %c0_i32 = arith.constant 0 : i32
    %c0_i32_0 = arith.constant 0 : i32
    return %c0_i32, %arg0 : i32, i32
  }
  func.func @transform_2(%arg0: i32, %arg1: i32) -> (i32, i32) {
    %c0_i32 = arith.constant 0 : i32
    return %arg1, %arg0 : i32, i32
  }
}

</mosaic_0001>

<llo_original>
// kernel: tpu_custom_call.1
$region0: #{tpu_custom_call.1}
  #allocation0 [shape = 'u32[]', space=smem, size = 0x4, offset = 0x4, fixed_abs, tag = 'smem constant byte address 0x4 - core index']
  #allocation1 [shape = 'u32[144,128]{1,0:T(1,128)}', space=vmem, size = 0x12000, scoped, tag = 'internal scratch']
  %s0 = inlined_call_operand.hbm [shape: f32[2,768], index: 0, kind: input, shape index: {}, may-alias: {0,2}]
  %s1 = inlined_call_operand.vmem [shape: f32[1,768], index: 1, kind: input, shape index: {}]
  %s2 = inlined_call_operand.hbm [shape: f32[2,768], index: 2, kind: output, shape index: {}, may-alias: {0,2}]
  %s3 = sld [smem:[#allocation0]]
  $region45: #{tpu_custom_call.1} parent=0
    _
  %s5 = ssub.s32 1, %s3
  %s6 = scalar_select 0, %s5, %s3
  $region1: #{tpu_custom_call.1} parent=0
    #allocation2 [shape = 'u8[6144]{0}', space=vmem, size = 0x1800, scoped, tag = 'input window, operand 0']
    #allocation3 [shape = 's32[2]{0}', space=sflag, size = 0x8, scoped, tag = 'scoped memory for tpu_custom_call.1']
    #allocation4 [shape = 's32[2]{0}', space=sflag, size = 0x8, scoped, tag = 'scoped memory for tpu_custom_call.1']
    #allocation5 [shape = 'u8[6144]{0}', space=vmem, size = 0x1800, scoped, tag = 'output window, operand 0']
    %7 = vsyncpa [#allocation3], 0
    %s8 = scalar_lea.sflag [#allocation3], 1
    %9 = vsyncpa %s8, 0
    %10 = vsyncpa [#allocation4], 0
    %s11 = scalar_lea.sflag [#allocation4], 1
    %12 = vsyncpa %s11, 0
    loop: start=0, step=1, limit=4
    $region2: #{tpu_custom_call.1} parent=1 // loop_pre_header
      _
    $region3: #{tpu_custom_call.1} parent=1 // loop_header
      %s14 = sphi 0, %s18
      %p15 = scmp.ge.s32.totalorder %s14, 4
      %s21 = sphi 0, %s33
      %s22 = sphi 0, %s29
      %s23 = sphi 0, %s21
      %s24 = sphi 0, %s22
      %s25 = sphi 0, %s23
      %s26 = sphi 0, %s24
      %s38 = sphi 0, %s40
      %s41 = sphi 0, %s38
      %s42 = sphi 0, %s41
      %s58 = sphi 0, %s42
      %s64 = sphi 0, %s66
      %s67 = sphi 0, %s64
      %s68 = sphi 0, %s67
      %s84 = sphi 0, %s68
      %s92 = sphi 0, %s94
      %s95 = sphi 0, %s92
      %s96 = sphi 0, %s95
      %s112 = sphi 0, %s96
    $region4: #{tpu_custom_call.1} parent=1 // loop_header_branch
      %17 = sbr.rel (%p15) target = $region8
    $region5: #{tpu_custom_call.1} parent=1 // loop_body
      %s19 = ssub.s32 %s14, 1
      %s20 = ssub.s32 %s14, 2
      %s27 = sadd.s32 1, %s22
      %p28 = scmp.ge.s32.totalorder %s27, 1
      %s29 = scalar_select %p28, 0, %s27
      %s30 = sadd.s32 1, %s21
      %s31 = scalar_select %p28, %s30, %s21
      %p32 = scmp.ge.s32.totalorder %s31, 2
      %s33 = scalar_select %p32, 0, %s31
      %s34 = ssub.s32 %s22, %s29
      %s35 = ssub.s32 %s21, %s33
      %s36 = sor.u32 %s34, %s35
      %p37 = scmp.eq.s32.totalorder %s36, 0
      %s39 = sadd.s32 %s38, 1
      %s40 = scalar_select %p37, %s38, %s39
      %p43 = pneg %p37
      %p44 = scmp.eq.s32.totalorder %s14, 1
      %p45 = por %p43, %p44
      %p46 = scmp.ne.s32.totalorder %s38, %s41
      %p47 = scmp.eq.s32.totalorder %s14, 0
      %p48 = por %p46, %p47
      %p49 = scmp.ne.s32.totalorder %s38, %s41
      %p50 = scmp.eq.s32.totalorder %s19, 1
      %p51 = por %p49, %p50
      %p52 = scmp.ne.s32.totalorder %s41, %s42
      %p53 = scmp.eq.s32.totalorder %s19, 0
      %p54 = por %p52, %p53
      %p55 = scmp.ne.s32.totalorder %s41, %s42
      %p56 = scmp.eq.s32.totalorder %s20, 1
      %p57 = por %p55, %p56
      %p59 = scmp.ne.s32.totalorder %s42, %s58
      %p60 = scmp.eq.s32.totalorder %s20, 0
      %p61 = por %p59, %p60
      %s62 = ssub.s32 %s21, %s33
      %p63 = scmp.eq.s32.totalorder %s62, 0
      %s65 = sadd.s32 %s64, 1
      %s66 = scalar_select %p63, %s64, %s65
      %p69 = pneg %p63
      %p70 = scmp.eq.s32.totalorder %s14, 1
      %p71 = por %p69, %p70
      %p72 = scmp.ne.s32.totalorder %s64, %s67
      %p73 = scmp.eq.s32.totalorder %s14, 0
      %p74 = por %p72, %p73
      %p75 = scmp.ne.s32.totalorder %s64, %s67
      %p76 = scmp.eq.s32.totalorder %s19, 1
      %p77 = por %p75, %p76
      %p78 = scmp.ne.s32.totalorder %s67, %s68
      %p79 = scmp.eq.s32.totalorder %s19, 0
      %p80 = por %p78, %p79
      %p81 = scmp.ne.s32.totalorder %s67, %s68
      %p82 = scmp.eq.s32.totalorder %s20, 1
      %p83 = por %p81, %p82
      %p85 = scmp.ne.s32.totalorder %s68, %s84
      %p86 = scmp.eq.s32.totalorder %s20, 0
      %p87 = por %p85, %p86
      %s88 = ssub.s32 %s22, %s29
      %s89 = ssub.s32 %s21, %s33
      %s90 = sor.u32 %s88, %s89
      %p91 = scmp.eq.s32.totalorder %s90, 0
      %s93 = sadd.s32 %s92, 1
      %s94 = scalar_select %p91, %s92, %s93
      %p97 = pneg %p91
      %p98 = scmp.eq.s32.totalorder %s14, 1
      %p99 = por %p97, %p98
      %p100 = scmp.ne.s32.totalorder %s92, %s95
      %p101 = scmp.eq.s32.totalorder %s14, 0
      %p102 = por %p100, %p101
      %p103 = scmp.ne.s32.totalorder %s92, %s95
      %p104 = scmp.eq.s32.totalorder %s19, 1
      %p105 = por %p103, %p104
      %p106 = scmp.ne.s32.totalorder %s95, %s96
      %p107 = scmp.eq.s32.totalorder %s19, 0
      %p108 = por %p106, %p107
      %p109 = scmp.ne.s32.totalorder %s95, %s96
      %p110 = scmp.eq.s32.totalorder %s20, 1
      %p111 = por %p109, %p110
      %p113 = scmp.ne.s32.totalorder %s96, %s112
      %p114 = scmp.eq.s32.totalorder %s20, 0
      %p115 = por %p113, %p114
      %p116 = scmp.le.s32.totalorder 1, %s14
      %p117 = scmp.lt.s32.totalorder %s14, 3
      %p118 = pnand %p116, %p117
      %p119 = pneg %p118
      // Predicated region
      $region9: #{tpu_custom_call.1} parent=5 // pred_check
        _
      $region10: #{tpu_custom_call.1} parent=5 // pred_check_branch
        %121 = sbr.rel (%p118) target = $region12
      $region11: #{tpu_custom_call.1} parent=5 // pred_region
        %s122 = ssub.s32 %s14, 1
      $region12: #{tpu_custom_call.1} parent=5 // pred_fallthru
        _
      %p123 = scmp.lt.s32.totalorder %s14, 2
      // Predicated region
      $region13: #{tpu_custom_call.1} parent=5 // pred_check
        %p124 = pneg %p123
      $region14: #{tpu_custom_call.1} parent=5 // pred_check_branch
        %126 = sbr.rel (%p124) target = $region16
      $region15: #{tpu_custom_call.1} parent=5 // pred_region
        // Predicated region
        $region17: #{tpu_custom_call.1} parent=15 // pred_check
          %p127 = pneg %p48
        $region18: #{tpu_custom_call.1} parent=15 // pred_check_branch
          %129 = sbr.rel (%p127) target = $region20
        $region19: #{tpu_custom_call.1} parent=15 // pred_region
          %s130 = sand.u32 %s38, 1
          %s131 = scalar_lea.sflag [#allocation3], %s130
          %s132 = sand.u32 %s38, 1
          %s133 = smul.addr %s132, 6
          %s134 = scalar_lea.vmem [#allocation2], %s133
          %s135 = smul.u32 3, %s21
          %s137 = ssub.s32 96, 96
          %138 = vsyncadd %s131, %s137
          %s139 = smul.addr %s22, 6
          %s140 = sadd.s32 %s135, %s139
          %s141 = smul.addr %s140, 32
          %s142 = scalar_lea.hbm %s0, %s141
          %s144 = sshll.u32 %s134, 4
          %s145 = int_to_ptr.vmem [resolvable:$true] %s144
          %147 = dma.hbm_to_vmem [thread:$0]  %s142, 96, %s145, %s131
        $region20: #{tpu_custom_call.1} parent=15 // pred_fallthru
          _
        // Predicated region
        $region21: #{tpu_custom_call.1} parent=15 // pred_check
          %p148 = pneg %p74
        $region22: #{tpu_custom_call.1} parent=15 // pred_check_branch
          %150 = sbr.rel (%p148) target = $region24
        $region23: #{tpu_custom_call.1} parent=15 // pred_region
          %s151 = smul.u32 3, %s21
          %p152 = scmp.lt.s32.totalorder %s151, 5
          %s153 = scalar_select %p152, %s151, 5
          %s154 = scalar_lea.vmem %s1, %s153
          %s155 = smul.u32 3, %s21
        $region24: #{tpu_custom_call.1} parent=15 // pred_fallthru
          _
      $region16: #{tpu_custom_call.1} parent=5 // pred_fallthru
        _
      %p156 = scmp.le.s32.totalorder 1, %s14
      %p157 = scmp.lt.s32.totalorder %s14, 3
      %p158 = pnand %p156, %p157
      %p159 = pneg %p158
      // Predicated region
      $region25: #{tpu_custom_call.1} parent=5 // pred_check
        _
      $region26: #{tpu_custom_call.1} parent=5 // pred_check_branch
        %161 = sbr.rel (%p158) target = $region28
      $region27: #{tpu_custom_call.1} parent=5 // pred_region
        %s162 = ssub.s32 %s14, 1
        %s163 = sand.u32 %s41, 1
        %s164 = scalar_lea.sflag [#allocation3], %s163
        %s165 = sand.u32 %s41, 1
        %s166 = smul.addr %s165, 6
        %s167 = scalar_lea.vmem [#allocation2], %s166
        // Predicated region
        $region29: #{tpu_custom_call.1} parent=27 // pred_check
          %p168 = pneg %p54
        $region30: #{tpu_custom_call.1} parent=27 // pred_check_branch
          %170 = sbr.rel (%p168) target = $region32
        $region31: #{tpu_custom_call.1} parent=27 // pred_region
          %171 = dma.done %s164, 96
        $region32: #{tpu_custom_call.1} parent=27 // pred_fallthru
          _
        %s172 = sand.u32 %s41, 1
        %s173 = scalar_lea.sflag [#allocation3], %s172
        %s174 = sand.u32 %s41, 1
        %s175 = smul.addr %s174, 6
        %s176 = scalar_lea.vmem [#allocation2], %s175
        %p177 = pneg %p54
        %p178 = pneg %p51
        %s179 = smul.u32 3, %s23
        %p180 = scmp.lt.s32.totalorder %s179, 5
        %s181 = scalar_select %p180, %s179, 5
        %s182 = scalar_lea.vmem %s1, %s181
        %p183 = pneg %p80
        %p184 = pneg %p77
        %p185 = pneg %p108
        %p186 = pneg %p105
        %s187 = sand.u32 %s95, 1
        %s188 = scalar_lea.sflag [#allocation4], %s187
        %s189 = sand.u32 %s95, 1
        %s190 = smul.addr %s189, 6
        %s191 = scalar_lea.vmem [#allocation5], %s190
        %s192 = smul.u32 3, %s23
        %s193 = smul.u32 3, %s23
        %p194 = scmp.lt.s32.totalorder %s193, 5
        %s195 = scalar_select %p194, %s193, 5
        %s196 = scalar_lea.vmem %s1, %s195
        %s197 = smul.u32 3, %s23
        %s198 = smul.u32 3, %s23
        %v199 = vld [vmem:[%s167] sm:$0x3f]
        %v200 = vld [vmem:[%s196] sm:$0x7]
        %v202 = vlaneseq
        %v203 = vshrl.u32 %v202, 7
        %v204 = vsub.s32 0, %v203
        %v205 = vrot.slane %v200, %v204
        %v206 = vlaneseq
        %v207 = vshrl.u32 %v206, 7
        %v208 = vsub.s32 1, %v207
        %v209 = vrot.slane %v200, %v208
        %v210 = vlaneseq
        %v211 = vshrl.u32 %v210, 7
        %v212 = vsub.s32 2, %v211
        %v213 = vrot.slane %v200, %v212
        %v214 = vcombine.low %v205, %v209
        %v216 = vunpack.c.l.s4 1983009808
        %v217 = vunpack.c.0.s8 %v216
        %v218 = vlaneseq
        %v219 = vshrl.u32 %v218, 7
        %v220 = vsub.s32 %v217, %v219
        %v221 = vrot.slane %v214, %v220
        %v223 = vunpack.c.l.s4 1983009808
        %v224 = vunpack.c.0.s8 %v223
        %v225 = vlaneseq
        %v226 = vshrl.u32 %v225, 7
        %v227 = vsub.s32 %v224, %v226
        %v228 = vrot.slane %v213, %v227
        %v229 = vcombine.low %v221, %v228
        %v231 = vadd.f32 %v199, %v229
        %232 = vst [vmem:[%s191] sm:$0x3f] %v231
        %s233 = sand.u32 %s95, 1
        %s234 = scalar_lea.sflag [#allocation4], %s233
        %s235 = sand.u32 %s95, 1
        %s236 = smul.addr %s235, 6
        %s237 = scalar_lea.vmem [#allocation5], %s236
        // Predicated region
        $region33: #{tpu_custom_call.1} parent=27 // pred_check
          %p238 = pneg %p105
        $region34: #{tpu_custom_call.1} parent=27 // pred_check_branch
          %240 = sbr.rel (%p238) target = $region36
        $region35: #{tpu_custom_call.1} parent=27 // pred_region
          %s241 = smul.u32 3, %s23
          %s243 = ssub.s32 96, 96
          %244 = vsyncadd %s234, %s243
          %s245 = smul.addr %s24, 6
          %s246 = sadd.s32 %s241, %s245
          %s247 = smul.addr %s246, 32
          %s248 = scalar_lea.hbm %s2, %s247
          %s250 = sshll.u32 %s237, 4
          %s251 = int_to_ptr.vmem [resolvable:$true] %s250
          %253 = dma.vmem_to_hbm [thread:$0]  %s251, 96, %s248, %s234
        $region36: #{tpu_custom_call.1} parent=27 // pred_fallthru
          _
      $region28: #{tpu_custom_call.1} parent=5 // pred_fallthru
        _
      %p254 = scmp.le.s32.totalorder 2, %s14
      // Predicated region
      $region37: #{tpu_custom_call.1} parent=5 // pred_check
        %p255 = pneg %p254
      $region38: #{tpu_custom_call.1} parent=5 // pred_check_branch
        %257 = sbr.rel (%p255) target = $region40
      $region39: #{tpu_custom_call.1} parent=5 // pred_region
        %s258 = ssub.s32 %s14, 2
        // Predicated region
        $region41: #{tpu_custom_call.1} parent=39 // pred_check
          %p259 = pneg %p111
        $region42: #{tpu_custom_call.1} parent=39 // pred_check_branch
          %261 = sbr.rel (%p259) target = $region44
        $region43: #{tpu_custom_call.1} parent=39 // pred_region
          %s262 = sand.u32 %s96, 1
          %s263 = scalar_lea.sflag [#allocation4], %s262
          %s264 = sand.u32 %s96, 1
          %s265 = smul.addr %s264, 6
          %s266 = scalar_lea.vmem [#allocation5], %s265
          %267 = dma.done %s263, 96
        $region44: #{tpu_custom_call.1} parent=39 // pred_fallthru
          _
      $region40: #{tpu_custom_call.1} parent=5 // pred_fallthru
        _
    $region6: #{tpu_custom_call.1} parent=1 // loop_footer
      %s18 = sadd.s32 1, %s14
    $region7: #{tpu_custom_call.1} parent=1 // loop_footer_branch
      %13 = sbr.rel target = $region3
    $region8: #{tpu_custom_call.1} parent=1 // loop_exit
      _
    %268 = vsyncpa [#allocation3], 1
    %s269 = scalar_lea.sflag [#allocation3], 1
    %270 = vsyncpa %s269, 1
    %271 = vsyncpa [#allocation4], 1
    %s272 = scalar_lea.sflag [#allocation4], 1
    %273 = vsyncpa %s272, 1

</llo_original>
